<compile_context>
chip_gen: v6e
topology: v6e:2x2x1
jax: 0.10.0
libtpu: 0.0.40
codegen_flags: <defaults>
</compile_context>

<pallas_src>
import math
import jax
import jax.numpy as jnp
from jax.experimental import pallas as pl
from jax.experimental.pallas import tpu as pltpu


_VMEM_LIMIT_BYTES = 48 << 20  # under v7x's 64 MiB physical VMEM; plenty on v5e/v6e


def _scale_kernel(x_ref, w_ref, o_ref):
    # x_ref: (block_n, M*C); w_ref: (1, M*C) -> implicit row (sublane) broadcast.
    o_ref[...] = x_ref[...] * w_ref[...]


def make_equivariant_degree_layer_scale_params(lmax, num_channels, scale_factor=2.0,
                                               dtype=jnp.float32):
    """Deterministic parameter init identical to the nn.Module __init__."""
    scales = jnp.array(
        [1.0] + [1.0 / math.sqrt(scale_factor * l) for l in range(1, lmax + 1)],
        dtype=dtype,
    )  # (lmax+1,)
    affine_weight = jnp.ones((1, lmax + 1, num_channels), dtype=dtype) * scales[None, :, None]

    # expand_index: maps each of the (lmax+1)^2 (l, m) rows to its degree l.
    expand_index = jnp.concatenate(
        [jnp.full((2 * l + 1,), l, dtype=jnp.int32) for l in range(lmax + 1)]
    )  # ((lmax+1)^2,)
    return affine_weight, expand_index


def expand_degree_weight(affine_weight, expand_index):
    """Hoisted precompute (do once at param-build time, not per forward call):
    (1, lmax+1, C) + ((lmax+1)^2,) -> (1, (lmax+1)^2 * C) lane-dense weight row."""
    w = jnp.take(affine_weight[0], expand_index, axis=0)  # (M, C)
    return w.reshape(1, -1)                               # (1, M*C)


def _choose_block_n(N, row_bytes, weight_bytes, itemsize, *, target_bytes=6 << 20,
                    vmem_limit_bytes=_VMEM_LIMIT_BYTES, min_grid_steps=2):
    """Pick the row-tile: ~target_bytes per block, VMEM-aware, >=2 grid steps if possible."""
    # Sublane-valid row granularity for the dtype (f32 -> 8, bf16 -> 16, int8 -> 32).
    sub = max(8, 32 // max(itemsize, 1))
    if N <= sub:
        return int(N)  # single full-extent block (exempt from the sublane rule)

    # ~6 MiB blocks keep the ~0.35 us per-grid-step overhead <10% of step time even at
    # v7x HBM bandwidth; v6e/v5e steps are longer so overhead is smaller still.
    bn = max(sub, (target_bytes // max(row_bytes, 1)) // sub * sub)

    # VMEM-aware clamp: double-buffered input + output blocks plus the (double-buffered)
    # resident weight must fit under the scoped VMEM limit, with 1 MiB headroom.
    budget = vmem_limit_bytes - 2 * weight_bytes - (1 << 20)
    max_bn = (budget // (4 * max(row_bytes, 1))) // sub * sub
    bn = max(sub, min(bn, max_bn))
    # TODO(synk): rows so wide that even `sub` rows overflow VMEM would need the lane
    # axis split as well; no realistic (lmax, C) hits this.

    # Cap so the grid has >= min_grid_steps steps -> the "parallel" axis shards across
    # both v7x TensorCores (measured-neutral on single-TC v5e/v6e).
    per_step = -(-N // min_grid_steps)            # cdiv(N, steps)
    per_step = -(-per_step // sub) * sub          # round up to sublane multiple
    multi_step_max = ((N - 1) // sub) * sub       # largest block still giving >=2 steps
    bn = min(bn, per_step, multi_step_max)
    return int(max(bn, sub))


def equivariant_degree_layer_scale(node_input, expanded_weight, *, block_n=None,
                                   vmem_limit_bytes=_VMEM_LIMIT_BYTES):
    """node_input: (N, M, C) with M = (lmax+1)^2.  expanded_weight: (1, M*C)."""
    N, M, C = node_input.shape
    MC = M * C
    assert expanded_weight.shape == (1, MC)

    weight = expanded_weight.astype(node_input.dtype)  # no-op / folded when dtypes match
    x2d = node_input.reshape(N, MC)                    # lane-dense 2D layout

    itemsize = jnp.dtype(node_input.dtype).itemsize
    row_bytes = MC * itemsize
    if block_n is None:
        block_n = _choose_block_n(N, row_bytes, row_bytes, itemsize,
                                  vmem_limit_bytes=vmem_limit_bytes)
    block_n = int(min(block_n, N))

    grid = (pl.cdiv(N, block_n),)

    cost = pl.CostEstimate(
        flops=N * MC,
        transcendentals=0,
        bytes_accessed=2 * N * MC * itemsize + MC * itemsize,
    )

    out2d = pl.pallas_call(
        _scale_kernel,
        out_shape=jax.ShapeDtypeStruct((N, MC), node_input.dtype),
        grid_spec=pltpu.PrefetchScalarGridSpec(
            num_scalar_prefetch=0,
            grid=grid,
            in_specs=[
                pl.BlockSpec((block_n, MC), lambda i: (i, 0)),
                pl.BlockSpec((1, MC), lambda i: (0, 0)),   # resident weight, DMA'd once
            ],
            out_specs=pl.BlockSpec((block_n, MC), lambda i: (i, 0)),
        ),
        input_output_aliases={0: 0},   # reuse the activation buffer for the output
        cost_estimate=cost,
        compiler_params=pltpu.CompilerParams(
            dimension_semantics=("parallel",),
            vmem_limit_bytes=vmem_limit_bytes,
        ),
    )(x2d, weight)

    return out2d.reshape(N, M, C)


def _reference(node_input, affine_weight, expand_index):
    weight = jnp.take(affine_weight, expand_index, axis=1)  # (1, M, C)
    return node_input * weight


if __name__ == "__main__":
    lmax = 3
    num_channels = 32
    M = (lmax + 1) ** 2  # 16

    affine_weight, expand_index = make_equivariant_degree_layer_scale_params(
        lmax, num_channels, scale_factor=2.0
    )
    # Hoisted once at parameter-build time (not per forward call).
    expanded_weight = expand_degree_weight(affine_weight, expand_index)

    # 1) Small N -> single full-extent block.
    N = 8
    node_input = jax.random.normal(jax.random.PRNGKey(0), (N, M, num_channels),
                                   dtype=jnp.float32)
    out = equivariant_degree_layer_scale(node_input, expanded_weight)
    out = jax.block_until_ready(out)
    ref = _reference(node_input, affine_weight, expand_index)
    assert out.shape == ref.shape and out.dtype == ref.dtype
    assert jnp.allclose(out, ref, atol=1e-6, rtol=1e-6), "mismatch vs reference"

    # 2) Ragged multi-step grid with an explicit block (masked last block).
    N2 = 24
    node_input2 = jax.random.normal(jax.random.PRNGKey(1), (N2, M, num_channels),
                                    dtype=jnp.float32)
    out2 = equivariant_degree_layer_scale(node_input2, expanded_weight, block_n=16)
    out2 = jax.block_until_ready(out2)
    ref2 = _reference(node_input2, affine_weight, expand_index)
    assert jnp.allclose(out2, ref2, atol=1e-6, rtol=1e-6), "mismatch vs reference (tiled)"

    # 3) Auto block choice on a larger N -> exercises the >=2-grid-step cap.
    N3 = 40
    node_input3 = jax.random.normal(jax.random.PRNGKey(2), (N3, M, num_channels),
                                    dtype=jnp.float32)
    out3 = equivariant_degree_layer_scale(node_input3, expanded_weight)
    out3 = jax.block_until_ready(out3)
    ref3 = _reference(node_input3, affine_weight, expand_index)
    assert jnp.allclose(out3, ref3, atol=1e-6, rtol=1e-6), "mismatch vs reference (auto)"

    print("KERNEL_OK")
</pallas_src>

<mosaic_0001>
module attributes {stable_mosaic.version = 11 : i64} {
  func.func @_scale_kernel(%arg0: i32, %arg1: memref<8x512xf32, #tpu.memory_space<vmem>>, %arg2: memref<1x512xf32, #tpu.memory_space<vmem>>, %arg3: memref<8x512xf32, #tpu.memory_space<vmem>>) attributes {dimension_semantics = [#tpu.dimension_semantics<parallel>], iteration_bounds = array<i64: 1>, scalar_prefetch = 0 : i64, scratch_operands = 0 : i64, tpu.core_type = #tpu.core_type<tc>, window_params = [{transform_indices = @transform_0, window_bounds = array<i64: 8, 512>}, {pipeline_mode = #tpu.pipeline_mode<synchronous>, transform_indices = @transform_1, window_bounds = array<i64: 1, 512>}, {transform_indices = @transform_2, window_bounds = array<i64: 8, 512>}]} {
    %c0 = arith.constant 0 : index
    %c0_0 = arith.constant 0 : index
    %0 = vector.load %arg1[%c0, %c0_0] : memref<8x512xf32, #tpu.memory_space<vmem>>, vector<8x512xf32>
    %c0_1 = arith.constant 0 : index
    %c0_2 = arith.constant 0 : index
    %1 = vector.load %arg2[%c0_1, %c0_2] : memref<1x512xf32, #tpu.memory_space<vmem>>, vector<1x512xf32>
    %2 = vector.broadcast %1 : vector<1x512xf32> to vector<8x512xf32>
    %3 = arith.mulf %0, %2 : vector<8x512xf32>
    %c0_3 = arith.constant 0 : index
    %c0_4 = arith.constant 0 : index
    %4 = vector.load %arg3[%c0_3, %c0_4] : memref<8x512xf32, #tpu.memory_space<vmem>>, vector<8x512xf32>
    tpu.vector_store %arg3[%c0_3, %c0_4], %3 {strides = array<i32>} : memref<8x512xf32, #tpu.memory_space<vmem>>, vector<8x512xf32>,
    return
  }
  func.func @transform_0(%arg0: i32) -> (i32, i32) {
    %c0_i32 = arith.constant 0 : i32
    %c0_i32_0 = arith.constant 0 : i32
    return %arg0, %c0_i32 : i32, i32
  }
  func.func @transform_1(%arg0: i32) -> (i32, i32) {
    %c0_i32 = arith.constant 0 : i32
    %c0_i32_0 = arith.constant 0 : i32
    %c0_i32_1 = arith.constant 0 : i32
    return %c0_i32, %c0_i32_0 : i32, i32
  }
  func.func @transform_2(%arg0: i32) -> (i32, i32) {
    %c0_i32 = arith.constant 0 : i32
    %c0_i32_0 = arith.constant 0 : i32
    return %arg0, %c0_i32 : i32, i32
  }
}

</mosaic_0001>

<llo_original>
// kernel: tpu_custom_call.1
$region0: #{tpu_custom_call.1}
  #allocation0 [shape = 'u32[]', space=smem, size = 0x4, offset = 0x4, fixed_abs, tag = 'smem constant byte address 0x4 - core index']
  #allocation1 [shape = 'u32[144,128]{1,0:T(1,128)}', space=vmem, size = 0x12000, scoped, tag = 'internal scratch']
  %s0 = inlined_call_operand.hbm [shape: f32[8,512], index: 0, kind: input, shape index: {}, may-alias: {0,2}]
  %s1 = inlined_call_operand.vmem [shape: f32[1,512], index: 1, kind: input, shape index: {}]
  %s2 = inlined_call_operand.hbm [shape: f32[8,512], index: 2, kind: output, shape index: {}, may-alias: {0,2}]
  %s3 = sld [smem:[#allocation0]]
  $region22: #{tpu_custom_call.1} parent=0
    _
  %s5 = ssub.s32 1, %s3
  %s6 = scalar_select 0, %s5, %s3
  $region1: #{tpu_custom_call.1} parent=0
    #allocation2 [shape = 'u8[16384]{0}', space=vmem, size = 0x4000, scoped, tag = 'input window, operand 0, single buffered']
    #allocation3 [shape = 's32[1]{0}', space=sflag, size = 0x4, scoped, tag = 'scoped memory for tpu_custom_call.1']
    #allocation4 [shape = 's32[1]{0}', space=sflag, size = 0x4, scoped, tag = 'scoped memory for tpu_custom_call.1']
    #allocation5 [shape = 'u8[16384]{0}', space=vmem, size = 0x4000, scoped, tag = 'output window, operand 0, single buffered']
    %7 = vsyncpa [#allocation3], 0
    %8 = vsyncpa [#allocation4], 0
    // Predicated region
    $region2: #{tpu_custom_call.1} parent=1 // pred_check
      _
    $region3: #{tpu_custom_call.1} parent=1 // pred_check_branch
      %10 = sbr.rel (0) target = $region5
    $region4: #{tpu_custom_call.1} parent=1 // pred_region
      %s12 = ssub.s32 512, 512
      %13 = vsyncadd [#allocation3], %s12
      %s15 = sshll.u32 [#allocation2], 4
      %s16 = int_to_ptr.vmem [resolvable:$true] %s15
      %18 = dma.hbm_to_vmem [thread:$0]  %s0, 512, %s16, [#allocation3]
    $region5: #{tpu_custom_call.1} parent=1 // pred_fallthru
      _
    // Predicated region
    $region6: #{tpu_custom_call.1} parent=1 // pred_check
      _
    $region7: #{tpu_custom_call.1} parent=1 // pred_check_branch
      %20 = sbr.rel (0) target = $region9
    $region8: #{tpu_custom_call.1} parent=1 // pred_region
      _
    $region9: #{tpu_custom_call.1} parent=1 // pred_fallthru
      _
    // Predicated region
    $region10: #{tpu_custom_call.1} parent=1 // pred_check
      _
    $region11: #{tpu_custom_call.1} parent=1 // pred_check_branch
      %22 = sbr.rel (0) target = $region13
    $region12: #{tpu_custom_call.1} parent=1 // pred_region
      %23 = dma.done [#allocation3], 512
    $region13: #{tpu_custom_call.1} parent=1 // pred_fallthru
      _
    %v24 = vld [vmem:[#allocation2] sm:$0xff]
    %v25 = vld [vmem:[#allocation2 + $0x8] sm:$0xff]
    %v26 = vld [vmem:[#allocation2 + $0x10] sm:$0xff]
    %v27 = vld [vmem:[#allocation2 + $0x18] sm:$0xff]
    %v28 = vld [vmem:[%s1] sm:$0xf]
    %v30 = vlaneseq
    %v31 = vshrl.u32 %v30, 7
    %v32 = vsub.s32 0, %v31
    %v33 = vrot.slane %v28, %v32
    %v34 = vlaneseq
    %v35 = vshrl.u32 %v34, 7
    %v36 = vsub.s32 1, %v35
    %v37 = vrot.slane %v28, %v36
    %v38 = vlaneseq
    %v39 = vshrl.u32 %v38, 7
    %v40 = vsub.s32 2, %v39
    %v41 = vrot.slane %v28, %v40
    %v42 = vlaneseq
    %v43 = vshrl.u32 %v42, 7
    %v44 = vsub.s32 3, %v43
    %v45 = vrot.slane %v28, %v44
    %v50 = vmul.f32 %v24, %v33
    %v51 = vmul.f32 %v25, %v37
    %v52 = vmul.f32 %v26, %v41
    %v53 = vmul.f32 %v27, %v45
    %54 = vst [vmem:[#allocation5] sm:$0xff] %v50
    %55 = vst [vmem:[#allocation5 + $0x8] sm:$0xff] %v51
    %56 = vst [vmem:[#allocation5 + $0x10] sm:$0xff] %v52
    %57 = vst [vmem:[#allocation5 + $0x18] sm:$0xff] %v53
    // Predicated region
    $region14: #{tpu_custom_call.1} parent=1 // pred_check
      _
    $region15: #{tpu_custom_call.1} parent=1 // pred_check_branch
      %59 = sbr.rel (0) target = $region17
    $region16: #{tpu_custom_call.1} parent=1 // pred_region
      %s61 = ssub.s32 512, 512
      %62 = vsyncadd [#allocation4], %s61
      %s64 = sshll.u32 [#allocation5], 4
      %s65 = int_to_ptr.vmem [resolvable:$true] %s64
      %67 = dma.vmem_to_hbm [thread:$0]  %s65, 512, %s2, [#allocation4]
    $region17: #{tpu_custom_call.1} parent=1 // pred_fallthru
      _
    // Predicated region
    $region18: #{tpu_custom_call.1} parent=1 // pred_check
      _
    $region19: #{tpu_custom_call.1} parent=1 // pred_check_branch
      %69 = sbr.rel (0) target = $region21
    $region20: #{tpu_custom_call.1} parent=1 // pred_region
      %70 = dma.done [#allocation4], 512
    $region21: #{tpu_custom_call.1} parent=1 // pred_fallthru
      _
    %71 = vsyncpa [#allocation3], 1
    %72 = vsyncpa [#allocation4], 1

</llo_original>
